<compile_context>
chip_gen: v5e
topology: v5e:2x2
jax: 0.10.0
libtpu: 0.0.40
codegen_flags: <defaults>
</compile_context>

<pallas_src>
import jax
import jax.numpy as jnp
from jax import lax
from jax.experimental import pallas as pl
from jax.experimental.pallas import tpu as pltpu


# ----------------------------------------------------------------------------
# VMEM budgeting (generation-aware)
# ----------------------------------------------------------------------------
def _vmem_capacity_bytes():
    """Per-core VMEM capacity; conservative 64 MiB fallback (v7x) if unknown."""
    try:
        cap = int(getattr(pltpu.get_tpu_info(), "vmem_capacity_bytes", 0))
        if cap > 0:
            return cap
    except Exception:
        pass
    return 64 * 1024 * 1024


def _working_set_bytes(c, n, tq, x_bytes, cd_bytes):
    """Per-grid-step VMEM working-set estimate (includes scratch & casts)."""
    return (
        2 * c * n * x_bytes          # x block, double-buffered
        + 2 * c * tq * 4             # output block, double-buffered (<=4B elems)
        + c * n * cd_bytes           # v scratch (persistent)
        + c * n * 4                  # f32 v intermediate during the q==0 step
        + 2 * n * tq * 4             # energy + p (f32)
        + n * tq * cd_bytes          # p cast for the PV matmul
        + 2 * c * tq * 4             # mxq (f32) + biased copy
        + c * tq * cd_bytes          # mxq cast
        + 2 * c * c * cd_bytes       # fused QK matrix + value weights
        + 8 * c * 4                  # small bias tiles (padded)
    )


def _pick_query_tile(n, c, x_bytes, cd_bytes, budget):
    """Largest lane-dense query tile whose working set fits the VMEM budget."""
    if n % 128 != 0:
        # TODO(synk): pad N to a lane multiple with key masking instead of a
        #             single (possibly non-lane-dense) tile for odd map sizes.
        return n
    for cand in (512, 256, 128):
        if n % cand == 0 and _working_set_bytes(c, n, cand, x_bytes, cd_bytes) <= budget:
            return cand
    return 128


# ----------------------------------------------------------------------------
# Kernel
# ----------------------------------------------------------------------------
def _make_attention_kernel(tq, compute_dtype, approx_recip):
    """Per-(batch, query-tile) kernel. Channels on sublanes, pixels on lanes."""

    def kernel(x_ref, m_ref, wcol_ref, wv_ref, bv_ref, o_ref, v_scr):
        # x_ref : (1, C, N)  feature map of the current batch element (compute dtype)
        # o_ref : (1, C, TQ) output slab for the current query tile
        # v_scr : (C, N)     per-batch value projection (persistent scratch)
        q = pl.program_id(1)
        q0 = pl.multiple_of(q * tq, tq)

        # ---- batch-invariant value projection: computed once per batch -------
        @pl.when(q == 0)
        def _():
            v = lax.dot_general(
                wv_ref[...], x_ref[0],
                (((1,), (0,)), ((), ())), preferred_element_type=jnp.float32)
            v = v + bv_ref[...]                       # (C, N) f32, gamma pre-folded
            v_scr[...] = v.astype(v_scr.dtype)

        x = x_ref[0]                                  # (C, N)  compute dtype
        xq = x_ref[0, :, pl.ds(q0, tq)]               # (C, TQ) query columns

        # ---- fused Q/K projection + key-side bias -----------------------------
        # m_ref = Wq^T Wk (C, C); wcol_ref = Wk^T bq (C, 1).
        mxq = lax.dot_general(
            m_ref[...], xq,
            (((0,), (0,)), ((), ())), preferred_element_type=jnp.float32)   # (C, TQ)
        mxq = mxq + wcol_ref[...]                     # fold key bias (VPU add)
        # energy[j, i] = sum_c x[c, j] * (mxq[c, i] + wcol[c])               (N, TQ)
        energy = lax.dot_general(
            x, mxq.astype(compute_dtype),
            (((0,), (0,)), ((), ())), preferred_element_type=jnp.float32)

        # ---- softmax over keys (axis 0), normalization deferred ----------------
        m_max = jnp.max(energy, axis=0, keepdims=True)        # (1, TQ)
        p = jnp.exp(energy - m_max)                           # (N, TQ) f32
        denom = jnp.sum(p, axis=0, keepdims=True)             # (1, TQ)
        inv = pl.reciprocal(denom, approx=approx_recip)

        # ---- attention-weighted value sum --------------------------------------
        # out_un[c, i] = sum_j v[c, j] * p[j, i]                              (C, TQ)
        out_un = lax.dot_general(
            v_scr[...], p.astype(compute_dtype),
            (((1,), (0,)), ((), ())), preferred_element_type=jnp.float32)
        out = out_un * inv                                    # per-query normalize

        o_ref[0] = (out + xq.astype(jnp.float32)).astype(o_ref.dtype)

    return kernel


# ----------------------------------------------------------------------------
# Wrapper
# ----------------------------------------------------------------------------
def self_attention_forward(x_nchw, wq, bq, wk, bk, wv, bv, gamma, *,
                           compute_dtype=jnp.float32, tq=None):
    """x_nchw: (B, C, W, H). wq/wk: (C//8, C), wv: (C, C), gamma: (1,)."""
    B, C, W, H = x_nchw.shape
    N = W * H
    f32 = jnp.float32

    cd_bytes = jnp.dtype(compute_dtype).itemsize
    x_bytes = cd_bytes                               # x is cast in the wrapper

    vmem_cap = _vmem_capacity_bytes()
    budget = int(0.8 * vmem_cap)                     # headroom for Mosaic scratch

    if tq is None:
        tq = _pick_query_tile(N, C, x_bytes, cd_bytes, budget)
    assert N % tq == 0, "query tile must divide W*H"
    num_q_tiles = N // tq

    # NCHW -> (B, C, N): pure reshape (pixels land on lanes); cast once here.
    x_bcn = x_nchw.reshape(B, C, N).astype(compute_dtype)

    # Fold the skinny q/k 1x1 convs into one (C, C) matrix + a key-side bias.
    m_fused = (wq.astype(f32).T @ wk.astype(f32)).astype(compute_dtype)   # Wq^T Wk
    w_col = (wk.astype(f32).T @ bq.astype(f32)).reshape(C, 1)             # Wk^T bq (f32)
    # Fold gamma into the value projection (scalar never enters the kernel).
    g = gamma.reshape(()).astype(f32)
    wv_s = (g * wv.astype(f32)).astype(compute_dtype)                     # (C, C)
    bv_s = (g * bv.astype(f32)).reshape(C, 1)                             # (C, 1) f32

    working = _working_set_bytes(C, N, tq, x_bytes, cd_bytes)
    vmem_limit = int(min(max(2 * working, 32 * 1024 * 1024), budget))

    kernel = _make_attention_kernel(
        tq, compute_dtype, approx_recip=(compute_dtype != jnp.float32))

    out_bcn = pl.pallas_call(
        kernel,
        out_shape=jax.ShapeDtypeStruct((B, C, N), x_nchw.dtype),
        grid_spec=pltpu.PrefetchScalarGridSpec(
            num_scalar_prefetch=0,
            grid=(B, num_q_tiles),
            in_specs=[
                pl.BlockSpec((1, C, N), lambda b, q: (b, 0, 0)),   # x (per batch)
                pl.BlockSpec((C, C), lambda b, q: (0, 0)),         # Wq^T Wk
                pl.BlockSpec((C, 1), lambda b, q: (0, 0)),         # Wk^T bq
                pl.BlockSpec((C, C), lambda b, q: (0, 0)),         # gamma*Wv
                pl.BlockSpec((C, 1), lambda b, q: (0, 0)),         # gamma*bv
            ],
            out_specs=pl.BlockSpec((1, C, tq), lambda b, q: (b, 0, q)),
            scratch_shapes=[pltpu.VMEM((C, N), compute_dtype)],    # per-batch V
        ),
        compiler_params=pltpu.CompilerParams(
            # q-axis must run sequentially on one core (V scratch reuse);
            # batch axis shards across megacores.
            dimension_semantics=("parallel", "arbitrary"),
            vmem_limit_bytes=vmem_limit),
    )(x_bcn, m_fused, w_col, wv_s, bv_s)

    # (B, C, N) -> NCHW: again a pure reshape.
    return out_bcn.reshape(B, C, W, H)


# ----------------------------------------------------------------------------
# Plain-JAX reference (mirrors the PyTorch SelfAttention forward, pool=False)
# ----------------------------------------------------------------------------
def _reference_forward(x, wq, bq, wk, bk, wv, bv, gamma):
    B, C, W, H = x.shape
    N = W * H
    x_flat = x.reshape(B, C, N)

    def conv1x1(w, b):
        return jnp.einsum('oc,bcn->bon', w, x_flat) + b[None, :, None]

    q = conv1x1(wq, bq)                          # (B, C8, N)
    k = conv1x1(wk, bk)                          # (B, C8, N)
    v = conv1x1(wv, bv)                          # (B, C, N)
    energy = jnp.einsum('bci,bcj->bij', q, k)    # (B, N, N)
    attn = jax.nn.softmax(energy, axis=-1)
    out = jnp.einsum('bcj,bij->bci', v, attn)    # (B, C, N)
    return gamma[0] * out.reshape(B, C, W, H) + x


if __name__ == "__main__":
    B, C, W, H = 2, 32, 16, 16            # N = 256 pixels per feature map
    C8 = max(C // 8, 1)

    key = jax.random.PRNGKey(0)
    k0, k1, k2, k3, k4, k5, k6 = jax.random.split(key, 7)

    x = jax.random.normal(k0, (B, C, W, H), dtype=jnp.float32)
    wq = 0.1 * jax.random.normal(k1, (C8, C), dtype=jnp.float32)
    bq = 0.1 * jax.random.normal(k2, (C8,), dtype=jnp.float32)
    wk = 0.1 * jax.random.normal(k3, (C8, C), dtype=jnp.float32)
    bk = 0.1 * jax.random.normal(k4, (C8,), dtype=jnp.float32)
    wv = 0.1 * jax.random.normal(k5, (C, C), dtype=jnp.float32)
    bv = 0.1 * jax.random.normal(k6, (C,), dtype=jnp.float32)

    gamma0 = jnp.zeros((1,), dtype=jnp.float32)         # module's init value
    gamma_nz = jnp.full((1,), 0.5, dtype=jnp.float32)   # exercise attention mix

    # f32 MXU path; tq=128 forces a multi-query-tile grid (B, N//TQ) = (2, 2)
    # so the per-batch V-scratch reuse across q tiles is exercised.
    y = jax.block_until_ready(
        self_attention_forward(x, wq, bq, wk, bk, wv, bv, gamma_nz, tq=128))
    y_ref = _reference_forward(x, wq, bq, wk, bk, wv, bv, gamma_nz)
    assert jnp.allclose(y, y_ref, atol=1e-4, rtol=1e-4), "mismatch (f32, gamma=0.5)"

    # gamma = 0: pure residual passthrough (module's initial state), default tq.
    y0 = jax.block_until_ready(
        self_attention_forward(x, wq, bq, wk, bk, wv, bv, gamma0))
    y0_ref = _reference_forward(x, wq, bq, wk, bk, wv, bv, gamma0)
    assert jnp.allclose(y0, y0_ref, atol=1e-5, rtol=1e-5), "mismatch (gamma=0)"

    # bf16 MXU operands (cast in the wrapper) / f32 accumulation & softmax.
    yb = jax.block_until_ready(
        self_attention_forward(x, wq, bq, wk, bk, wv, bv, gamma_nz,
                               compute_dtype=jnp.bfloat16))
    assert jnp.allclose(yb, y_ref, atol=3e-2, rtol=3e-2), "mismatch (bf16 MXU)"

    print("KERNEL_OK")
</pallas_src>

<mosaic_0001>
module attributes {stable_mosaic.version = 11 : i64} {
  func.func @kernel(%arg0: i32, %arg1: i32, %arg2: memref<1x32x256xf32, #tpu.memory_space<vmem>>, %arg3: memref<32x32xf32, #tpu.memory_space<vmem>>, %arg4: memref<32x1xf32, #tpu.memory_space<vmem>>, %arg5: memref<32x32xf32, #tpu.memory_space<vmem>>, %arg6: memref<32x1xf32, #tpu.memory_space<vmem>>, %arg7: memref<1x32x128xf32, #tpu.memory_space<vmem>>, %arg8: memref<32x256xf32, #tpu.memory_space<vmem>>) attributes {dimension_semantics = [#tpu.dimension_semantics<parallel>, #tpu.dimension_semantics<arbitrary>], iteration_bounds = array<i64: 2, 2>, scalar_prefetch = 0 : i64, scratch_operands = 1 : i64, tpu.core_type = #tpu.core_type<tc>, window_params = [{transform_indices = @transform_0, window_bounds = array<i64: 1, 32, 256>}, {pipeline_mode = #tpu.pipeline_mode<synchronous>, transform_indices = @transform_1, window_bounds = array<i64: 32, 32>}, {pipeline_mode = #tpu.pipeline_mode<synchronous>, transform_indices = @transform_2, window_bounds = array<i64: 32, 1>}, {pipeline_mode = #tpu.pipeline_mode<synchronous>, transform_indices = @transform_3, window_bounds = array<i64: 32, 32>}, {pipeline_mode = #tpu.pipeline_mode<synchronous>, transform_indices = @transform_4, window_bounds = array<i64: 32, 1>}, {transform_indices = @transform_5, window_bounds = array<i64: 1, 32, 128>}]} {
    %c128_i32 = arith.constant 128 : i32
    %0 = arith.muli %arg1, %c128_i32 : i32
    %1 = tpu.assume_multiple %0, 128 : i32
    %c0_i32 = arith.constant 0 : i32
    %2 = arith.cmpi eq, %arg1, %c0_i32 : i32
    %3 = arith.extui %2 : i1 to i32
    %c0_i32_0 = arith.constant 0 : i32
    %4 = arith.cmpi ne, %3, %c0_i32_0 : i32
    scf.if %4 {
      %c0_18 = arith.constant 0 : index
      %c0_19 = arith.constant 0 : index
      %32 = vector.load %arg5[%c0_18, %c0_19] : memref<32x32xf32, #tpu.memory_space<vmem>>, vector<32x32xf32>
      %c0_20 = arith.constant 0 : index
      %c0_21 = arith.constant 0 : index
      %c0_22 = arith.constant 0 : index
      %33 = vector.load %arg2[%c0_20, %c0_21, %c0_22] : memref<1x32x256xf32, #tpu.memory_space<vmem>>, vector<1x32x256xf32>
      %34 = vector.shape_cast %33 : vector<1x32x256xf32> to vector<32x256xf32>
      %cst_23 = arith.constant dense<0.000000e+00> : vector<32x256xf32>
      %35 = tpu.matmul %32, %34, %cst_23 {dimension_numbers = #tpu.dot_dimension_numbers<[1], [0], [0], [1], [0, 0, 1, 1], [], []>} : vector<32x32xf32>, vector<32x256xf32>, vector<32x256xf32> -> vector<32x256xf32>
      %c0_24 = arith.constant 0 : index
      %c0_25 = arith.constant 0 : index
      %36 = vector.load %arg6[%c0_24, %c0_25] : memref<32x1xf32, #tpu.memory_space<vmem>>, vector<32x1xf32>
      %37 = vector.broadcast %36 : vector<32x1xf32> to vector<32x256xf32>
      %38 = arith.addf %35, %37 : vector<32x256xf32>
      %c0_26 = arith.constant 0 : index
      %c0_27 = arith.constant 0 : index
      %39 = vector.load %arg8[%c0_26, %c0_27] : memref<32x256xf32, #tpu.memory_space<vmem>>, vector<32x256xf32>
      tpu.vector_store %arg8[%c0_26, %c0_27], %38 {strides = array<i32>} : memref<32x256xf32, #tpu.memory_space<vmem>>, vector<32x256xf32>,
    } else {
    }
    %c0 = arith.constant 0 : index
    %c0_1 = arith.constant 0 : index
    %c0_2 = arith.constant 0 : index
    %5 = vector.load %arg2[%c0, %c0_1, %c0_2] : memref<1x32x256xf32, #tpu.memory_space<vmem>>, vector<1x32x256xf32>
    %6 = vector.shape_cast %5 : vector<1x32x256xf32> to vector<32x256xf32>
    %c0_3 = arith.constant 0 : index
    %c0_4 = arith.constant 0 : index
    %7 = arith.index_cast %1 : i32 to index
    %8 = vector.load %arg2[%c0_3, %c0_4, %7] : memref<1x32x256xf32, #tpu.memory_space<vmem>>, vector<1x32x128xf32>
    %9 = vector.shape_cast %8 : vector<1x32x128xf32> to vector<32x128xf32>
    %c0_5 = arith.constant 0 : index
    %c0_6 = arith.constant 0 : index
    %10 = vector.load %arg3[%c0_5, %c0_6] : memref<32x32xf32, #tpu.memory_space<vmem>>, vector<32x32xf32>
    %cst = arith.constant dense<0.000000e+00> : vector<32x128xf32>
    %11 = tpu.matmul %10, %9, %cst {dimension_numbers = #tpu.dot_dimension_numbers<[0], [0], [1], [1], [0, 1, 1, 1], [], []>} : vector<32x32xf32>, vector<32x128xf32>, vector<32x128xf32> -> vector<32x128xf32>
    %c0_7 = arith.constant 0 : index
    %c0_8 = arith.constant 0 : index
    %12 = vector.load %arg4[%c0_7, %c0_8] : memref<32x1xf32, #tpu.memory_space<vmem>>, vector<32x1xf32>
    %13 = vector.broadcast %12 : vector<32x1xf32> to vector<32x128xf32>
    %14 = arith.addf %11, %13 : vector<32x128xf32>
    %cst_9 = arith.constant dense<0.000000e+00> : vector<256x128xf32>
    %15 = tpu.matmul %6, %14, %cst_9 {dimension_numbers = #tpu.dot_dimension_numbers<[0], [0], [1], [1], [0, 1, 1, 1], [], []>} : vector<32x256xf32>, vector<32x128xf32>, vector<256x128xf32> -> vector<256x128xf32>
    %cst_10 = arith.constant dense<0xFF800000> : vector<128xf32>
    %16 = vector.multi_reduction <maximumf>, %15, %cst_10 [0] : vector<256x128xf32> to vector<128xf32>
    %17 = vector.shape_cast %16 : vector<128xf32> to vector<1x128xf32>
    %18 = vector.broadcast %17 : vector<1x128xf32> to vector<256x128xf32>
    %19 = arith.subf %15, %18 : vector<256x128xf32>
    %20 = math.exp %19 : vector<256x128xf32>
    %cst_11 = arith.constant dense<0.000000e+00> : vector<128xf32>
    %21 = vector.multi_reduction <add>, %20, %cst_11 [0] : vector<256x128xf32> to vector<128xf32>
    %22 = vector.shape_cast %21 : vector<128xf32> to vector<1x128xf32>
    %23 = tpu.reciprocal %22 : vector<1x128xf32> -> vector<1x128xf32>
    %c0_12 = arith.constant 0 : index
    %c0_13 = arith.constant 0 : index
    %24 = vector.load %arg8[%c0_12, %c0_13] : memref<32x256xf32, #tpu.memory_space<vmem>>, vector<32x256xf32>
    %cst_14 = arith.constant dense<0.000000e+00> : vector<32x128xf32>
    %25 = tpu.matmul %24, %20, %cst_14 {dimension_numbers = #tpu.dot_dimension_numbers<[1], [0], [0], [1], [0, 0, 1, 1], [], []>} : vector<32x256xf32>, vector<256x128xf32>, vector<32x128xf32> -> vector<32x128xf32>
    %26 = vector.broadcast %23 : vector<1x128xf32> to vector<32x128xf32>
    %27 = arith.mulf %25, %26 : vector<32x128xf32>
    %28 = arith.addf %27, %9 : vector<32x128xf32>
    %c0_15 = arith.constant 0 : index
    %c0_16 = arith.constant 0 : index
    %c0_17 = arith.constant 0 : index
    %29 = vector.load %arg7[%c0_15, %c0_16, %c0_17] : memref<1x32x128xf32, #tpu.memory_space<vmem>>, vector<1x32x128xf32>
    %30 = vector.shape_cast %29 : vector<1x32x128xf32> to vector<32x128xf32>
    %31 = vector.shape_cast %28 : vector<32x128xf32> to vector<1x32x128xf32>
    tpu.vector_store %arg7[%c0_15, %c0_16, %c0_17], %31 {strides = array<i32>} : memref<1x32x128xf32, #tpu.memory_space<vmem>>, vector<1x32x128xf32>,
    return
  }
  func.func @transform_0(%arg0: i32, %arg1: i32) -> (i32, i32, i32) {
    %c0_i32 = arith.constant 0 : i32
    %c0_i32_0 = arith.constant 0 : i32
    %c0_i32_1 = arith.constant 0 : i32
    return %arg0, %c0_i32, %c0_i32_0 : i32, i32, i32
  }
  func.func @transform_1(%arg0: i32, %arg1: i32) -> (i32, i32) {
    %c0_i32 = arith.constant 0 : i32
    %c0_i32_0 = arith.constant 0 : i32
    %c0_i32_1 = arith.constant 0 : i32
    return %c0_i32, %c0_i32_0 : i32, i32
  }
  func.func @transform_2(%arg0: i32, %arg1: i32) -> (i32, i32) {
    %c0_i32 = arith.constant 0 : i32
    %c0_i32_0 = arith.constant 0 : i32
    %c0_i32_1 = arith.constant 0 : i32
    return %c0_i32, %c0_i32_0 : i32, i32
  }
  func.func @transform_3(%arg0: i32, %arg1: i32) -> (i32, i32) {
    %c0_i32 = arith.constant 0 : i32
    %c0_i32_0 = arith.constant 0 : i32
    %c0_i32_1 = arith.constant 0 : i32
    return %c0_i32, %c0_i32_0 : i32, i32
  }
  func.func @transform_4(%arg0: i32, %arg1: i32) -> (i32, i32) {
    %c0_i32 = arith.constant 0 : i32
    %c0_i32_0 = arith.constant 0 : i32
    %c0_i32_1 = arith.constant 0 : i32
    return %c0_i32, %c0_i32_0 : i32, i32
  }
  func.func @transform_5(%arg0: i32, %arg1: i32) -> (i32, i32, i32) {
    %c0_i32 = arith.constant 0 : i32
    %c0_i32_0 = arith.constant 0 : i32
    return %arg0, %c0_i32, %arg1 : i32, i32, i32
  }
}

</mosaic_0001>

<llo_original>
// kernel: tpu_custom_call.1
$region0: #{tpu_custom_call.1}
  #allocation0 [shape = 'u32[]', space=smem, size = 0x4, offset = 0x4, fixed_abs, tag = 'smem constant byte address 0x4 - core index']
  #allocation1 [shape = 'u32[72,128]{1,0:T(1,128)}', space=vmem, size = 0x9000, scoped, tag = 'internal scratch']
  #allocation2 [shape = 'f32[32,256]{1,0:T(8,128)}', space=vmem, size = 0x8000, scoped, tag = 'scratch operand']
  %s0 = inlined_call_operand.hbm [shape: f32[2,32,256], index: 0, kind: input, shape index: {}]
  %s1 = inlined_call_operand.vmem [shape: f32[32,32], index: 1, kind: input, shape index: {}]
  %s2 = inlined_call_operand.vmem [shape: f32[32,1], index: 2, kind: input, shape index: {}]
  %s3 = inlined_call_operand.vmem [shape: f32[32,32], index: 3, kind: input, shape index: {}]
  %s4 = inlined_call_operand.vmem [shape: f32[32,1], index: 4, kind: input, shape index: {}]
  %s5 = inlined_call_operand.hbm [shape: f32[2,32,256], index: 5, kind: output, shape index: {}]
  %s6 = sld [smem:[#allocation0]]
  $region61: #{tpu_custom_call.1} parent=0
    _
  %s8 = ssub.s32 1, %s6
  %s9 = scalar_select 0, %s8, %s6
  $region1: #{tpu_custom_call.1} parent=0
    #allocation3 [shape = 'u8[65536]{0}', space=vmem, size = 0x10000, scoped, tag = 'input window, operand 0']
    #allocation4 [shape = 's32[2]{0}', space=sflag, size = 0x8, scoped, tag = 'scoped memory for tpu_custom_call.1']
    #allocation5 [shape = 's32[2]{0}', space=sflag, size = 0x8, scoped, tag = 'scoped memory for tpu_custom_call.1']
    #allocation6 [shape = 'u8[32768]{0}', space=vmem, size = 0x8000, scoped, tag = 'output window, operand 0']
    %10 = vsyncpa [#allocation4], 0
    %s11 = scalar_lea.sflag [#allocation4], 1
    %12 = vsyncpa %s11, 0
    %13 = vsyncpa [#allocation5], 0
    %s14 = scalar_lea.sflag [#allocation5], 1
    %15 = vsyncpa %s14, 0
    loop: start=0, step=1, limit=6
    $region2: #{tpu_custom_call.1} parent=1 // loop_pre_header
      _
    $region3: #{tpu_custom_call.1} parent=1 // loop_header
      %s17 = sphi 0, %s21
      %p18 = scmp.ge.s32.totalorder %s17, 6
      %s24 = sphi 0, %s36
      %s25 = sphi 0, %s32
      %s26 = sphi 0, %s24
      %s27 = sphi 0, %s25
      %s28 = sphi 0, %s26
      %s29 = sphi 0, %s27
      %s39 = sphi 0, %s41
      %s42 = sphi 0, %s39
      %s43 = sphi 0, %s42
      %s59 = sphi 0, %s43
      %s63 = sphi 0, %s63
      %s65 = sphi 0, %s63
      %s66 = sphi 0, %s65
      %s80 = sphi 0, %s66
      %s84 = sphi 0, %s84
      %s86 = sphi 0, %s84
      %s87 = sphi 0, %s86
      %s101 = sphi 0, %s87
      %s105 = sphi 0, %s105
      %s107 = sphi 0, %s105
      %s108 = sphi 0, %s107
      %s122 = sphi 0, %s108
      %s126 = sphi 0, %s126
      %s128 = sphi 0, %s126
      %s129 = sphi 0, %s128
      %s143 = sphi 0, %s129
      %s151 = sphi 0, %s153
      %s154 = sphi 0, %s151
      %s155 = sphi 0, %s154
      %s171 = sphi 0, %s155
    $region4: #{tpu_custom_call.1} parent=1 // loop_header_branch
      %20 = sbr.rel (%p18) target = $region8
    $region5: #{tpu_custom_call.1} parent=1 // loop_body
      %s22 = ssub.s32 %s17, 1
      %s23 = ssub.s32 %s17, 2
      %s30 = sadd.s32 1, %s25
      %p31 = scmp.ge.s32.totalorder %s30, 2
      %s32 = scalar_select %p31, 0, %s30
      %s33 = sadd.s32 1, %s24
      %s34 = scalar_select %p31, %s33, %s24
      %p35 = scmp.ge.s32.totalorder %s34, 2
      %s36 = scalar_select %p35, 0, %s34
      %s37 = ssub.s32 %s24, %s36
      %p38 = scmp.eq.s32.totalorder %s37, 0
      %s40 = sadd.s32 %s39, 1
      %s41 = scalar_select %p38, %s39, %s40
      %p44 = pneg %p38
      %p45 = scmp.eq.s32.totalorder %s17, 3
      %p46 = por %p44, %p45
      %p47 = scmp.ne.s32.totalorder %s39, %s42
      %p48 = scmp.eq.s32.totalorder %s17, 0
      %p49 = por %p47, %p48
      %p50 = scmp.ne.s32.totalorder %s39, %s42
      %p51 = scmp.eq.s32.totalorder %s22, 3
      %p52 = por %p50, %p51
      %p53 = scmp.ne.s32.totalorder %s42, %s43
      %p54 = scmp.eq.s32.totalorder %s22, 0
      %p55 = por %p53, %p54
      %p56 = scmp.ne.s32.totalorder %s42, %s43
      %p57 = scmp.eq.s32.totalorder %s23, 3
      %p58 = por %p56, %p57
      %p60 = scmp.ne.s32.totalorder %s43, %s59
      %p61 = scmp.eq.s32.totalorder %s23, 0
      %p62 = por %p60, %p61
      %s64 = sadd.s32 %s63, 1
      %p67 = scmp.eq.s32.totalorder %s17, 3
      %p68 = scmp.ne.s32.totalorder %s63, %s65
      %p69 = scmp.eq.s32.totalorder %s17, 0
      %p70 = por %p68, %p69
      %p71 = scmp.ne.s32.totalorder %s63, %s65
      %p72 = scmp.eq.s32.totalorder %s22, 3
      %p73 = por %p71, %p72
      %p74 = scmp.ne.s32.totalorder %s65, %s66
      %p75 = scmp.eq.s32.totalorder %s22, 0
      %p76 = por %p74, %p75
      %p77 = scmp.ne.s32.totalorder %s65, %s66
      %p78 = scmp.eq.s32.totalorder %s23, 3
      %p79 = por %p77, %p78
      %p81 = scmp.ne.s32.totalorder %s66, %s80
      %p82 = scmp.eq.s32.totalorder %s23, 0
      %p83 = por %p81, %p82
      %s85 = sadd.s32 %s84, 1
      %p88 = scmp.eq.s32.totalorder %s17, 3
      %p89 = scmp.ne.s32.totalorder %s84, %s86
      %p90 = scmp.eq.s32.totalorder %s17, 0
      %p91 = por %p89, %p90
      %p92 = scmp.ne.s32.totalorder %s84, %s86
      %p93 = scmp.eq.s32.totalorder %s22, 3
      %p94 = por %p92, %p93
      %p95 = scmp.ne.s32.totalorder %s86, %s87
      %p96 = scmp.eq.s32.totalorder %s22, 0
      %p97 = por %p95, %p96
      %p98 = scmp.ne.s32.totalorder %s86, %s87
      %p99 = scmp.eq.s32.totalorder %s23, 3
      %p100 = por %p98, %p99
      %p102 = scmp.ne.s32.totalorder %s87, %s101
      %p103 = scmp.eq.s32.totalorder %s23, 0
      %p104 = por %p102, %p103
      %s106 = sadd.s32 %s105, 1
      %p109 = scmp.eq.s32.totalorder %s17, 3
      %p110 = scmp.ne.s32.totalorder %s105, %s107
      %p111 = scmp.eq.s32.totalorder %s17, 0
      %p112 = por %p110, %p111
      %p113 = scmp.ne.s32.totalorder %s105, %s107
      %p114 = scmp.eq.s32.totalorder %s22, 3
      %p115 = por %p113, %p114
      %p116 = scmp.ne.s32.totalorder %s107, %s108
      %p117 = scmp.eq.s32.totalorder %s22, 0
      %p118 = por %p116, %p117
      %p119 = scmp.ne.s32.totalorder %s107, %s108
      %p120 = scmp.eq.s32.totalorder %s23, 3
      %p121 = por %p119, %p120
      %p123 = scmp.ne.s32.totalorder %s108, %s122
      %p124 = scmp.eq.s32.totalorder %s23, 0
      %p125 = por %p123, %p124
      %s127 = sadd.s32 %s126, 1
      %p130 = scmp.eq.s32.totalorder %s17, 3
      %p131 = scmp.ne.s32.totalorder %s126, %s128
      %p132 = scmp.eq.s32.totalorder %s17, 0
      %p133 = por %p131, %p132
      %p134 = scmp.ne.s32.totalorder %s126, %s128
      %p135 = scmp.eq.s32.totalorder %s22, 3
      %p136 = por %p134, %p135
      %p137 = scmp.ne.s32.totalorder %s128, %s129
      %p138 = scmp.eq.s32.totalorder %s22, 0
      %p139 = por %p137, %p138
      %p140 = scmp.ne.s32.totalorder %s128, %s129
      %p141 = scmp.eq.s32.totalorder %s23, 3
      %p142 = por %p140, %p141
      %p144 = scmp.ne.s32.totalorder %s129, %s143
      %p145 = scmp.eq.s32.totalorder %s23, 0
      %p146 = por %p144, %p145
      %s147 = ssub.s32 %s24, %s36
      %s148 = ssub.s32 %s25, %s32
      %s149 = sor.u32 %s147, %s148
      %p150 = scmp.eq.s32.totalorder %s149, 0
      %s152 = sadd.s32 %s151, 1
      %s153 = scalar_select %p150, %s151, %s152
      %p156 = pneg %p150
      %p157 = scmp.eq.s32.totalorder %s17, 3
      %p158 = por %p156, %p157
      %p159 = scmp.ne.s32.totalorder %s151, %s154
      %p160 = scmp.eq.s32.totalorder %s17, 0
      %p161 = por %p159, %p160
      %p162 = scmp.ne.s32.totalorder %s151, %s154
      %p163 = scmp.eq.s32.totalorder %s22, 3
      %p164 = por %p162, %p163
      %p165 = scmp.ne.s32.totalorder %s154, %s155
      %p166 = scmp.eq.s32.totalorder %s22, 0
      %p167 = por %p165, %p166
      %p168 = scmp.ne.s32.totalorder %s154, %s155
      %p169 = scmp.eq.s32.totalorder %s23, 3
      %p170 = por %p168, %p169
      %p172 = scmp.ne.s32.totalorder %s155, %s171
      %p173 = scmp.eq.s32.totalorder %s23, 0
      %p174 = por %p172, %p173
      %p175 = scmp.le.s32.totalorder 1, %s17
      %p176 = scmp.lt.s32.totalorder %s17, 5
      %p177 = pnand %p175, %p176
      %p178 = pneg %p177
      // Predicated region
      $region9: #{tpu_custom_call.1} parent=5 // pred_check
        _
      $region10: #{tpu_custom_call.1} parent=5 // pred_check_branch
        %180 = sbr.rel (%p177) target = $region12
      $region11: #{tpu_custom_call.1} parent=5 // pred_region
        %s181 = ssub.s32 %s17, 1
        // Predicated region
        $region13: #{tpu_custom_call.1} parent=11 // pred_check
          %p182 = pneg %p76
        $region14: #{tpu_custom_call.1} parent=11 // pred_check_branch
          %184 = sbr.rel (%p182) target = $region16
        $region15: #{tpu_custom_call.1} parent=11 // pred_region
          _
        $region16: #{tpu_custom_call.1} parent=11 // pred_fallthru
          _
        // Predicated region
        $region17: #{tpu_custom_call.1} parent=11 // pred_check
          %p185 = pneg %p97
        $region18: #{tpu_custom_call.1} parent=11 // pred_check_branch
          %187 = sbr.rel (%p185) target = $region20
        $region19: #{tpu_custom_call.1} parent=11 // pred_region
          _
        $region20: #{tpu_custom_call.1} parent=11 // pred_fallthru
          _
        // Predicated region
        $region21: #{tpu_custom_call.1} parent=11 // pred_check
          %p188 = pneg %p118
        $region22: #{tpu_custom_call.1} parent=11 // pred_check_branch
          %190 = sbr.rel (%p188) target = $region24
        $region23: #{tpu_custom_call.1} parent=11 // pred_region
          _
        $region24: #{tpu_custom_call.1} parent=11 // pred_fallthru
          _
        // Predicated region
        $region25: #{tpu_custom_call.1} parent=11 // pred_check
          %p191 = pneg %p139
        $region26: #{tpu_custom_call.1} parent=11 // pred_check_branch
          %193 = sbr.rel (%p191) target = $region28
        $region27: #{tpu_custom_call.1} parent=11 // pred_region
          _
        $region28: #{tpu_custom_call.1} parent=11 // pred_fallthru
          _
      $region12: #{tpu_custom_call.1} parent=5 // pred_fallthru
        _
      %p194 = scmp.lt.s32.totalorder %s17, 4
      // Predicated region
      $region29: #{tpu_custom_call.1} parent=5 // pred_check
        %p195 = pneg %p194
      $region30: #{tpu_custom_call.1} parent=5 // pred_check_branch
        %197 = sbr.rel (%p195) target = $region32
      $region31: #{tpu_custom_call.1} parent=5 // pred_region
        // Predicated region
        $region33: #{tpu_custom_call.1} parent=31 // pred_check
          %p198 = pneg %p49
        $region34: #{tpu_custom_call.1} parent=31 // pred_check_branch
          %200 = sbr.rel (%p198) target = $region36
        $region35: #{tpu_custom_call.1} parent=31 // pred_region
          %s201 = sand.u32 %s39, 1
          %s202 = scalar_lea.sflag [#allocation4], %s201
          %s203 = sand.u32 %s39, 1
          %s204 = smul.addr %s203, 64
          %s205 = scalar_lea.vmem [#allocation3], %s204
          %207 = vsyncadd %s202, 0
          %s208 = smul.addr %s24, 8
          %s209 = smul.addr %s208, 8
          %s210 = scalar_lea.hbm %s0, %s209
          %s211 = sshll.u32 %s210, 4
          %s212 = int_to_ptr.hbm [resolvable:$true] %s211
          %s213 = sshll.u32 %s205, 4
          %s214 = int_to_ptr.vmem [resolvable:$true] %s213
          %219 = dma.hbm_to_vmem [thread:$0]  %s212, 1024, %s214, %s202, 256, 256, 16
        $region36: #{tpu_custom_call.1} parent=31 // pred_fallthru
          _
      $region32: #{tpu_custom_call.1} parent=5 // pred_fallthru
        _
      %p220 = scmp.le.s32.totalorder 1, %s17
      %p221 = scmp.lt.s32.totalorder %s17, 5
      %p222 = pnand %p220, %p221
      %p223 = pneg %p222
      // Predicated region
      $region37: #{tpu_custom_call.1} parent=5 // pred_check
        _
      $region38: #{tpu_custom_call.1} parent=5 // pred_check_branch
        %225 = sbr.rel (%p222) target = $region40
      $region39: #{tpu_custom_call.1} parent=5 // pred_region
        %s226 = ssub.s32 %s17, 1
        %s227 = sand.u32 %s42, 1
        %s228 = scalar_lea.sflag [#allocation4], %s227
        %s229 = sand.u32 %s42, 1
        %s230 = smul.addr %s229, 64
        %s231 = scalar_lea.vmem [#allocation3], %s230
        // Predicated region
        $region41: #{tpu_custom_call.1} parent=39 // pred_check
          %p232 = pneg %p55
        $region42: #{tpu_custom_call.1} parent=39 // pred_check_branch
          %234 = sbr.rel (%p232) target = $region44
        $region43: #{tpu_custom_call.1} parent=39 // pred_region
          %236 = dma.done %s228, 1024
        $region44: #{tpu_custom_call.1} parent=39 // pred_fallthru
          _
        %s237 = sand.u32 %s42, 1
        %s238 = scalar_lea.sflag [#allocation4], %s237
        %s239 = sand.u32 %s42, 1
        %s240 = smul.addr %s239, 64
        %s241 = scalar_lea.vmem [#allocation3], %s240
        %p242 = pneg %p55
        %p243 = pneg %p52
        %p244 = pneg %p76
        %p245 = pneg %p73
        %p246 = pneg %p97
        %p247 = pneg %p94
        %p248 = pneg %p118
        %p249 = pneg %p115
        %p250 = pneg %p139
        %p251 = pneg %p136
        %p252 = pneg %p167
        %p253 = pneg %p164
        %s254 = sand.u32 %s154, 1
        %s255 = scalar_lea.sflag [#allocation5], %s254
        %s256 = sand.u32 %s154, 1
        %s257 = smul.addr %s256, 32
        %s258 = scalar_lea.vmem [#allocation6], %s257
        %s259 = smul.u32 %s27, 128
        %p260 = scmp.eq.s32.totalorder %s27, 0
        // Predicated region
        $region45: #{tpu_custom_call.1} parent=39 // pred_check
          %p261 = pneg %p260
        $region46: #{tpu_custom_call.1} parent=39 // pred_check_branch
          %263 = sbr.rel (%p261) target = $region48
        $region47: #{tpu_custom_call.1} parent=39 // pred_region
          %v264 = vld [vmem:[%s3] sm:$0xff]
          %v265 = vld [vmem:[%s3 + $0x8] sm:$0xff]
          %v266 = vld [vmem:[%s3 + $0x10] sm:$0xff]
          %v267 = vld [vmem:[%s3 + $0x18] sm:$0xff]
          %v268 = vld [vmem:[%s231] sm:$0xff]
          %v269 = vld [vmem:[%s231 + $0x8] sm:$0xff]
          %v270 = vld [vmem:[%s231 + $0x10] sm:$0xff]
          %v271 = vld [vmem:[%s231 + $0x18] sm:$0xff]
          %v272 = vld [vmem:[%s231 + $0x20] sm:$0xff]
          %v273 = vld [vmem:[%s231 + $0x28] sm:$0xff]
          %v274 = vld [vmem:[%s231 + $0x30] sm:$0xff]
          %v275 = vld [vmem:[%s231 + $0x38] sm:$0xff]
          %v276 = vld [vmem:[%s4] sm:$0xff]
          %v277 = vld [vmem:[%s4 + $0x8] sm:$0xff]
          %v278 = vld [vmem:[%s4 + $0x10] sm:$0xff]
          %v279 = vld [vmem:[%s4 + $0x18] sm:$0xff]
          %281 = vset.pattern.permute.xlu0 0
          %282 = vperm.xlu0 %281, %v276
          %v283 = vpop.permute.xlu0 %282
          %286 = vset.pattern.permute.xlu0 0
          %287 = vperm.xlu0 %286, %v277
          %v288 = vpop.permute.xlu0 %287
          %291 = vset.pattern.permute.xlu0 0
          %292 = vperm.xlu0 %291, %v278
          %v293 = vpop.permute.xlu0 %292
          %296 = vset.pattern.permute.xlu0 0
          %297 = vperm.xlu0 %296, %v279
          %v298 = vpop.permute.xlu0 %297
          %vm300 = vcmask 261120
          %v302 = vsel %vm300, %v264, 0
          %v305 = vsel %vm300, %v265, 0
          %v308 = vsel %vm300, %v266, 0
          %v311 = vsel %vm300, %v267, 0
          %313 = vmatpush.msra.mxu0 0.0
          %314 = vmatpush.msra.mxu0 0.0
          %315 = vmatpush.msra.mxu0 0.0
          %316 = vmatpush.msra.mxu0 0.0
          %317 = vmatpush.msra.mxu0 0.0
          %318 = vmatpush.msra.mxu0 0.0
          %319 = vmatpush.msra.mxu0 0.0
          %320 = vmatpush.msra.mxu0 0.0
          %321 = vmatpush.msra.mxu0 0.0
          %322 = vmatpush.msra.mxu0 0.0
          %323 = vmatpush.msra.mxu0 0.0
          %324 = vmatpush.msra.mxu0 0.0
          %325 = vmatpush.msra.mxu0 %v274
          %326 = vmatpush.msra.mxu0 %v272
          %327 = vmatpush.msra.mxu0 %v270
          %328 = vmatpush.msra.mxu0 %v268
          %329 = vmatmul.f32.gmra.mxu0 %v302
          %v330 = vpop.f32.mrf.mxu0
          %v331 = vadd.f32 %v283, %v330
          %332 = vmatmul.f32.gmra.mxu0 %v305
          %v333 = vpop.f32.mrf.mxu0
          %v334 = vadd.f32 %v288, %v333
          %335 = vmatmul.f32.gmra.mxu0 %v308
          %v336 = vpop.f32.mrf.mxu0
          %v337 = vadd.f32 %v293, %v336
          %338 = vmatmul.f32.gmra.mxu0 %v311
          %v339 = vpop.f32.mrf.mxu0
          %v340 = vadd.f32 %v298, %v339
          %341 = vdwg.mxu0
          %342 = vmatpush.msra.mxu0 0.0
          %343 = vmatpush.msra.mxu0 0.0
          %344 = vmatpush.msra.mxu0 0.0
          %345 = vmatpush.msra.mxu0 0.0
          %346 = vmatpush.msra.mxu0 0.0
          %347 = vmatpush.msra.mxu0 0.0
          %348 = vmatpush.msra.mxu0 0.0
          %349 = vmatpush.msra.mxu0 0.0
          %350 = vmatpush.msra.mxu0 0.0
          %351 = vmatpush.msra.mxu0 0.0
          %352 = vmatpush.msra.mxu0 0.0
          %353 = vmatpush.msra.mxu0 0.0
          %354 = vmatpush.msra.mxu0 %v275
          %355 = vmatpush.msra.mxu0 %v273
          %356 = vmatpush.msra.mxu0 %v271
          %357 = vmatpush.msra.mxu0 %v269
          %358 = vmatmul.f32.gmra.mxu0 %v302
          %v359 = vpop.f32.mrf.mxu0
          %v360 = vadd.f32 %v283, %v359
          %361 = vmatmul.f32.gmra.mxu0 %v305
          %v362 = vpop.f32.mrf.mxu0
          %v363 = vadd.f32 %v288, %v362
          %364 = vmatmul.f32.gmra.mxu0 %v308
          %v365 = vpop.f32.mrf.mxu0
          %v366 = vadd.f32 %v293, %v365
          %367 = vmatmul.f32.gmra.mxu0 %v311
          %v368 = vpop.f32.mrf.mxu0
          %v369 = vadd.f32 %v298, %v368
          %370 = vdwg.mxu0
          %371 = vst [vmem:[#allocation2] sm:$0xff] %v331
          %372 = vst [vmem:[#allocation2 + $0x8] sm:$0xff] %v360
          %373 = vst [vmem:[#allocation2 + $0x10] sm:$0xff] %v334
          %374 = vst [vmem:[#allocation2 + $0x18] sm:$0xff] %v363
          %375 = vst [vmem:[#allocation2 + $0x20] sm:$0xff] %v337
          %376 = vst [vmem:[#allocation2 + $0x28] sm:$0xff] %v366
          %377 = vst [vmem:[#allocation2 + $0x30] sm:$0xff] %v340
          %378 = vst [vmem:[#allocation2 + $0x38] sm:$0xff] %v369
        $region48: #{tpu_custom_call.1} parent=39 // pred_fallthru
          _
        %v379 = vld [vmem:[%s231] sm:$0xff]
        %v380 = vld [vmem:[%s231 + $0x8] sm:$0xff]
        %v381 = vld [vmem:[%s231 + $0x10] sm:$0xff]
        %v382 = vld [vmem:[%s231 + $0x18] sm:$0xff]
        %v383 = vld [vmem:[%s231 + $0x20] sm:$0xff]
        %v384 = vld [vmem:[%s231 + $0x28] sm:$0xff]
        %v385 = vld [vmem:[%s231 + $0x30] sm:$0xff]
        %v386 = vld [vmem:[%s231 + $0x38] sm:$0xff]
        %s387 = sshra.s32 %s259, 7
        %s388 = sand.u32 %s259, 127
        %s389 = smul.addr %s387, 8
        %s390 = scalar_lea.vmem %s231, %s389 [#allocation3]
        %v391 = vld [vmem:[%s390] sm:$0xff]
        %v392 = vld [vmem:[%s390 + $0x10] sm:$0xff]
        %v393 = vld [vmem:[%s390 + $0x20] sm:$0xff]
        %v394 = vld [vmem:[%s390 + $0x30] sm:$0xff]
        %v395 = vld [vmem:[%s1] sm:$0xff]
        %v396 = vld [vmem:[%s1 + $0x8] sm:$0xff]
        %v397 = vld [vmem:[%s1 + $0x10] sm:$0xff]
        %v398 = vld [vmem:[%s1 + $0x18] sm:$0xff]
        %v399 = vld [vmem:[%s2] sm:$0xff]
        %v400 = vld [vmem:[%s2 + $0x8] sm:$0xff]
        %v401 = vld [vmem:[%s2 + $0x10] sm:$0xff]
        %v402 = vld [vmem:[%s2 + $0x18] sm:$0xff]
        %404 = vset.pattern.permute.xlu0 0
        %405 = vperm.xlu0 %404, %v399
        %v406 = vpop.permute.xlu0 %405
        %409 = vset.pattern.permute.xlu0 0
        %410 = vperm.xlu0 %409, %v400
        %v411 = vpop.permute.xlu0 %410
        %414 = vset.pattern.permute.xlu0 0
        %415 = vperm.xlu0 %414, %v401
        %v416 = vpop.permute.xlu0 %415
        %419 = vset.pattern.permute.xlu0 0
        %420 = vperm.xlu0 %419, %v402
        %v421 = vpop.permute.xlu0 %420
        %423 = vxpose.xlu0.b32.start [1/16] %v395, 128
        %424 = vxpose.xlu0.b32.cont [2/16] %v396, 128
        %425 = vxpose.xlu0.b32.cont [3/16] %v397, 128
        %426 = vxpose.xlu0.b32.cont [4/16] %v398, 128
        %427 = vxpose.xlu0.b32.cont [5/16] 0.0, 128
        %428 = vxpose.xlu0.b32.cont [6/16] 0.0, 128
        %429 = vxpose.xlu0.b32.cont [7/16] 0.0, 128
        %430 = vxpose.xlu0.b32.cont [8/16] 0.0, 128
        %431 = vxpose.xlu0.b32.cont [9/16] 0.0, 128
        %432 = vxpose.xlu0.b32.cont [10/16] 0.0, 128
        %433 = vxpose.xlu0.b32.cont [11/16] 0.0, 128
        %434 = vxpose.xlu0.b32.cont [12/16] 0.0, 128
        %435 = vxpose.xlu0.b32.cont [13/16] 0.0, 128
        %436 = vxpose.xlu0.b32.cont [14/16] 0.0, 128
        %437 = vxpose.xlu0.b32.cont [15/16] 0.0, 128
        %438 = vxpose.xlu0.b32.end [16/16] 0.0, 128
        %v439 = vpop.trf.xlu0
        %v440 = vpop.trf.xlu0
        %v441 = vpop.trf.xlu0
        %v442 = vpop.trf.xlu0
        %v443 = vpop.trf.xlu0
        %v444 = vpop.trf.xlu0
        %v445 = vpop.trf.xlu0
        %v446 = vpop.trf.xlu0
        %v447 = vpop.trf.xlu0
        %v448 = vpop.trf.xlu0
        %v449 = vpop.trf.xlu0
        %v450 = vpop.trf.xlu0
        %v451 = vpop.trf.xlu0
        %v452 = vpop.trf.xlu0
        %v453 = vpop.trf.xlu0
        %v454 = vpop.trf.xlu0
        %vm455 = vcmask 261120
        %v457 = vsel %vm455, %v439, 0
        %v460 = vsel %vm455, %v440, 0
        %v463 = vsel %vm455, %v441, 0
        %v466 = vsel %vm455, %v442, 0
        %468 = vmatpush.msra.mxu0 0.0
        %469 = vmatpush.msra.mxu0 0.0
        %470 = vmatpush.msra.mxu0 0.0
        %471 = vmatpush.msra.mxu0 0.0
        %472 = vmatpush.msra.mxu0 0.0
        %473 = vmatpush.msra.mxu0 0.0
        %474 = vmatpush.msra.mxu0 0.0
        %475 = vmatpush.msra.mxu0 0.0
        %476 = vmatpush.msra.mxu0 0.0
        %477 = vmatpush.msra.mxu0 0.0
        %478 = vmatpush.msra.mxu0 0.0
        %479 = vmatpush.msra.mxu0 0.0
        %480 = vmatpush.msra.mxu0 %v394
        %481 = vmatpush.msra.mxu0 %v393
        %482 = vmatpush.msra.mxu0 %v392
        %483 = vmatpush.msra.mxu0 %v391
        %484 = vmatmul.f32.gmra.mxu0 %v457
        %v485 = vpop.f32.mrf.mxu0
        %v486 = vadd.f32 %v406, %v485
        %487 = vmatmul.f32.gmra.mxu0 %v460
        %v488 = vpop.f32.mrf.mxu0
        %v489 = vadd.f32 %v411, %v488
        %490 = vmatmul.f32.gmra.mxu0 %v463
        %v491 = vpop.f32.mrf.mxu0
        %v492 = vadd.f32 %v416, %v491
        %493 = vmatmul.f32.gmra.mxu0 %v466
        %v494 = vpop.f32.mrf.mxu0
        %v495 = vadd.f32 %v421, %v494
        %496 = vdwg.mxu0
        %497 = vxpose.xlu0.b32.start [1/16] %v379, 128
        %498 = vxpose.xlu0.b32.cont [2/16] %v381, 128
        %499 = vxpose.xlu0.b32.cont [3/16] %v383, 128
        %500 = vxpose.xlu0.b32.cont [4/16] %v385, 128
        %501 = vxpose.xlu0.b32.cont [5/16] 0.0, 128
        %502 = vxpose.xlu0.b32.cont [6/16] 0.0, 128
        %503 = vxpose.xlu0.b32.cont [7/16] 0.0, 128
        %504 = vxpose.xlu0.b32.cont [8/16] 0.0, 128
        %505 = vxpose.xlu0.b32.cont [9/16] 0.0, 128
        %506 = vxpose.xlu0.b32.cont [10/16] 0.0, 128
        %507 = vxpose.xlu0.b32.cont [11/16] 0.0, 128
        %508 = vxpose.xlu0.b32.cont [12/16] 0.0, 128
        %509 = vxpose.xlu0.b32.cont [13/16] 0.0, 128
        %510 = vxpose.xlu0.b32.cont [14/16] 0.0, 128
        %511 = vxpose.xlu0.b32.cont [15/16] 0.0, 128
        %512 = vxpose.xlu0.b32.end [16/16] 0.0, 128
        %v513 = vpop.trf.xlu0
        %v514 = vpop.trf.xlu0
        %v515 = vpop.trf.xlu0
        %v516 = vpop.trf.xlu0
        %v517 = vpop.trf.xlu0
        %v518 = vpop.trf.xlu0
        %v519 = vpop.trf.xlu0
        %v520 = vpop.trf.xlu0
        %v521 = vpop.trf.xlu0
        %v522 = vpop.trf.xlu0
        %v523 = vpop.trf.xlu0
        %v524 = vpop.trf.xlu0
        %v525 = vpop.trf.xlu0
        %v526 = vpop.trf.xlu0
        %v527 = vpop.trf.xlu0
        %v528 = vpop.trf.xlu0
        %529 = vxpose.xlu0.b32.start [1/16] %v380, 128
        %530 = vxpose.xlu0.b32.cont [2/16] %v382, 128
        %531 = vxpose.xlu0.b32.cont [3/16] %v384, 128
        %532 = vxpose.xlu0.b32.cont [4/16] %v386, 128
        %533 = vxpose.xlu0.b32.cont [5/16] 0.0, 128
        %534 = vxpose.xlu0.b32.cont [6/16] 0.0, 128
        %535 = vxpose.xlu0.b32.cont [7/16] 0.0, 128
        %536 = vxpose.xlu0.b32.cont [8/16] 0.0, 128
        %537 = vxpose.xlu0.b32.cont [9/16] 0.0, 128
        %538 = vxpose.xlu0.b32.cont [10/16] 0.0, 128
        %539 = vxpose.xlu0.b32.cont [11/16] 0.0, 128
        %540 = vxpose.xlu0.b32.cont [12/16] 0.0, 128
        %541 = vxpose.xlu0.b32.cont [13/16] 0.0, 128
        %542 = vxpose.xlu0.b32.cont [14/16] 0.0, 128
        %543 = vxpose.xlu0.b32.cont [15/16] 0.0, 128
        %544 = vxpose.xlu0.b32.end [16/16] 0.0, 128
        %v545 = vpop.trf.xlu0
        %v546 = vpop.trf.xlu0
        %v547 = vpop.trf.xlu0
        %v548 = vpop.trf.xlu0
        %v549 = vpop.trf.xlu0
        %v550 = vpop.trf.xlu0
        %v551 = vpop.trf.xlu0
        %v552 = vpop.trf.xlu0
        %v553 = vpop.trf.xlu0
        %v554 = vpop.trf.xlu0
        %v555 = vpop.trf.xlu0
        %v556 = vpop.trf.xlu0
        %v557 = vpop.trf.xlu0
        %v558 = vpop.trf.xlu0
        %v559 = vpop.trf.xlu0
        %v560 = vpop.trf.xlu0
        %v562 = vsel %vm455, %v513, 0
        %v565 = vsel %vm455, %v514, 0
        %v568 = vsel %vm455, %v515, 0
        %v571 = vsel %vm455, %v516, 0
        %v574 = vsel %vm455, %v517, 0
        %v577 = vsel %vm455, %v518, 0
        %v580 = vsel %vm455, %v519, 0
        %v583 = vsel %vm455, %v520, 0
        %v586 = vsel %vm455, %v521, 0
        %v589 = vsel %vm455, %v522, 0
        %v592 = vsel %vm455, %v523, 0
        %v595 = vsel %vm455, %v524, 0
        %v598 = vsel %vm455, %v525, 0
        %v601 = vsel %vm455, %v526, 0
        %v604 = vsel %vm455, %v527, 0
        %v607 = vsel %vm455, %v528, 0
        %v610 = vsel %vm455, %v545, 0
        %v613 = vsel %vm455, %v546, 0
        %v616 = vsel %vm455, %v547, 0
        %v619 = vsel %vm455, %v548, 0
        %v622 = vsel %vm455, %v549, 0
        %v625 = vsel %vm455, %v550, 0
        %v628 = vsel %vm455, %v551, 0
        %v631 = vsel %vm455, %v552, 0
        %v634 = vsel %vm455, %v553, 0
        %v637 = vsel %vm455, %v554, 0
        %v640 = vsel %vm455, %v555, 0
        %v643 = vsel %vm455, %v556, 0
        %v646 = vsel %vm455, %v557, 0
        %v649 = vsel %vm455, %v558, 0
        %v652 = vsel %vm455, %v559, 0
        %v655 = vsel %vm455, %v560, 0
        %657 = vmatpush.msra.mxu0 0.0
        %658 = vmatpush.msra.mxu0 0.0
        %659 = vmatpush.msra.mxu0 0.0
        %660 = vmatpush.msra.mxu0 0.0
        %661 = vmatpush.msra.mxu0 0.0
        %662 = vmatpush.msra.mxu0 0.0
        %663 = vmatpush.msra.mxu0 0.0
        %664 = vmatpush.msra.mxu0 0.0
        %665 = vmatpush.msra.mxu0 0.0
        %666 = vmatpush.msra.mxu0 0.0
        %667 = vmatpush.msra.mxu0 0.0
        %668 = vmatpush.msra.mxu0 0.0
        %669 = vmatpush.msra.mxu0 %v495
        %670 = vmatpush.msra.mxu0 %v492
        %671 = vmatpush.msra.mxu0 %v489
        %672 = vmatpush.msra.mxu0 %v486
        %673 = vmatmul.f32.gmra.mxu0 %v562
        %v674 = vpop.f32.mrf.mxu0
        %v675 = vadd.f32 0.0, %v674
        %676 = vmatmul.f32.gmra.mxu0 %v565
        %v677 = vpop.f32.mrf.mxu0
        %v678 = vadd.f32 0.0, %v677
        %679 = vmatmul.f32.gmra.mxu0 %v568
        %v680 = vpop.f32.mrf.mxu0
        %v681 = vadd.f32 0.0, %v680
        %682 = vmatmul.f32.gmra.mxu0 %v571
        %v683 = vpop.f32.mrf.mxu0
        %v684 = vadd.f32 0.0, %v683
        %685 = vmatmul.f32.gmra.mxu0 %v574
        %v686 = vpop.f32.mrf.mxu0
        %v687 = vadd.f32 0.0, %v686
        %688 = vmatmul.f32.gmra.mxu0 %v577
        %v689 = vpop.f32.mrf.mxu0
        %v690 = vadd.f32 0.0, %v689
        %691 = vmatmul.f32.gmra.mxu0 %v580
        %v692 = vpop.f32.mrf.mxu0
        %v693 = vadd.f32 0.0, %v692
        %694 = vmatmul.f32.gmra.mxu0 %v583
        %v695 = vpop.f32.mrf.mxu0
        %v696 = vadd.f32 0.0, %v695
        %697 = vmatmul.f32.gmra.mxu0 %v586
        %v698 = vpop.f32.mrf.mxu0
        %v699 = vadd.f32 0.0, %v698
        %700 = vmatmul.f32.gmra.mxu0 %v589
        %v701 = vpop.f32.mrf.mxu0
        %v702 = vadd.f32 0.0, %v701
        %703 = vmatmul.f32.gmra.mxu0 %v592
        %v704 = vpop.f32.mrf.mxu0
        %v705 = vadd.f32 0.0, %v704
        %706 = vmatmul.f32.gmra.mxu0 %v595
        %v707 = vpop.f32.mrf.mxu0
        %v708 = vadd.f32 0.0, %v707
        %709 = vmatmul.f32.gmra.mxu0 %v598
        %v710 = vpop.f32.mrf.mxu0
        %v711 = vadd.f32 0.0, %v710
        %712 = vmatmul.f32.gmra.mxu0 %v601
        %v713 = vpop.f32.mrf.mxu0
        %v714 = vadd.f32 0.0, %v713
        %715 = vmatmul.f32.gmra.mxu0 %v604
        %v716 = vpop.f32.mrf.mxu0
        %v717 = vadd.f32 0.0, %v716
        %718 = vmatmul.f32.gmra.mxu0 %v607
        %v719 = vpop.f32.mrf.mxu0
        %v720 = vadd.f32 0.0, %v719
        %721 = vmatmul.f32.gmra.mxu0 %v610
        %v722 = vpop.f32.mrf.mxu0
        %v723 = vadd.f32 0.0, %v722
        %724 = vmatmul.f32.gmra.mxu0 %v613
        %v725 = vpop.f32.mrf.mxu0
        %v726 = vadd.f32 0.0, %v725
        %727 = vmatmul.f32.gmra.mxu0 %v616
        %v728 = vpop.f32.mrf.mxu0
        %v729 = vadd.f32 0.0, %v728
        %730 = vmatmul.f32.gmra.mxu0 %v619
        %v731 = vpop.f32.mrf.mxu0
        %v732 = vadd.f32 0.0, %v731
        %733 = vmatmul.f32.gmra.mxu0 %v622
        %v734 = vpop.f32.mrf.mxu0
        %v735 = vadd.f32 0.0, %v734
        %736 = vmatmul.f32.gmra.mxu0 %v625
        %v737 = vpop.f32.mrf.mxu0
        %v738 = vadd.f32 0.0, %v737
        %739 = vmatmul.f32.gmra.mxu0 %v628
        %v740 = vpop.f32.mrf.mxu0
        %v741 = vadd.f32 0.0, %v740
        %742 = vmatmul.f32.gmra.mxu0 %v631
        %v743 = vpop.f32.mrf.mxu0
        %v744 = vadd.f32 0.0, %v743
        %745 = vmatmul.f32.gmra.mxu0 %v634
        %v746 = vpop.f32.mrf.mxu0
        %v747 = vadd.f32 0.0, %v746
        %748 = vmatmul.f32.gmra.mxu0 %v637
        %v749 = vpop.f32.mrf.mxu0
        %v750 = vadd.f32 0.0, %v749
        %751 = vmatmul.f32.gmra.mxu0 %v640
        %v752 = vpop.f32.mrf.mxu0
        %v753 = vadd.f32 0.0, %v752
        %754 = vmatmul.f32.gmra.mxu0 %v643
        %v755 = vpop.f32.mrf.mxu0
        %v756 = vadd.f32 0.0, %v755
        %757 = vmatmul.f32.gmra.mxu0 %v646
        %v758 = vpop.f32.mrf.mxu0
        %v759 = vadd.f32 0.0, %v758
        %760 = vmatmul.f32.gmra.mxu0 %v649
        %v761 = vpop.f32.mrf.mxu0
        %v762 = vadd.f32 0.0, %v761
        %763 = vmatmul.f32.gmra.mxu0 %v652
        %v764 = vpop.f32.mrf.mxu0
        %v765 = vadd.f32 0.0, %v764
        %766 = vmatmul.f32.gmra.mxu0 %v655
        %v767 = vpop.f32.mrf.mxu0
        %v768 = vadd.f32 0.0, %v767
        %769 = vdwg.mxu0
        %v770 = vmax.f32 %v675, %v687
        %v771 = vmax.f32 %v678, %v690
        %v772 = vmax.f32 %v681, %v693
        %v773 = vmax.f32 %v684, %v696
        %v774 = vmax.f32 %v770, %v699
        %v775 = vmax.f32 %v771, %v702
        %v776 = vmax.f32 %v772, %v705
        %v777 = vmax.f32 %v773, %v708
        %v778 = vmax.f32 %v774, %v711
        %v779 = vmax.f32 %v775, %v714
        %v780 = vmax.f32 %v776, %v717
        %v781 = vmax.f32 %v777, %v720
        %v782 = vmax.f32 %v778, %v723
        %v783 = vmax.f32 %v779, %v726
        %v784 = vmax.f32 %v780, %v729
        %v785 = vmax.f32 %v781, %v732
        %v786 = vmax.f32 %v782, %v735
        %v787 = vmax.f32 %v783, %v738
        %v788 = vmax.f32 %v784, %v741
        %v789 = vmax.f32 %v785, %v744
        %v790 = vmax.f32 %v786, %v747
        %v791 = vmax.f32 %v787, %v750
        %v792 = vmax.f32 %v788, %v753
        %v793 = vmax.f32 %v789, %v756
        %v794 = vmax.f32 %v790, %v759
        %v795 = vmax.f32 %v791, %v762
        %v796 = vmax.f32 %v792, %v765
        %v797 = vmax.f32 %v793, %v768
        %v798 = vmax.f32 %v794, %v795
        %v799 = vmax.f32 %v796, %v797
        %v800 = vmax.f32 %v798, %v799
        %v801 = vrot.slane %v800, 4
        %v802 = vmax.f32 %v800, %v801
        %v803 = vrot.slane %v802, 2
        %v804 = vmax.f32 %v802, %v803
        %v805 = vrot.slane %v804, 1
        %v806 = vmax.f32 %v804, %v805
        %v807 = vsub.f32 %v675, %v806
        %v808 = vsub.f32 %v678, %v806
        %v809 = vsub.f32 %v681, %v806
        %v810 = vsub.f32 %v684, %v806
        %v811 = vsub.f32 %v687, %v806
        %v812 = vsub.f32 %v690, %v806
        %v813 = vsub.f32 %v693, %v806
        %v814 = vsub.f32 %v696, %v806
        %v815 = vsub.f32 %v699, %v806
        %v816 = vsub.f32 %v702, %v806
        %v817 = vsub.f32 %v705, %v806
        %v818 = vsub.f32 %v708, %v806
        %v819 = vsub.f32 %v711, %v806
        %v820 = vsub.f32 %v714, %v806
        %v821 = vsub.f32 %v717, %v806
        %v822 = vsub.f32 %v720, %v806
        %v823 = vsub.f32 %v723, %v806
        %v824 = vsub.f32 %v726, %v806
        %v825 = vsub.f32 %v729, %v806
        %v826 = vsub.f32 %v732, %v806
        %v827 = vsub.f32 %v735, %v806
        %v828 = vsub.f32 %v738, %v806
        %v829 = vsub.f32 %v741, %v806
        %v830 = vsub.f32 %v744, %v806
        %v831 = vsub.f32 %v747, %v806
        %v832 = vsub.f32 %v750, %v806
        %v833 = vsub.f32 %v753, %v806
        %v834 = vsub.f32 %v756, %v806
        %v835 = vsub.f32 %v759, %v806
        %v836 = vsub.f32 %v762, %v806
        %v837 = vsub.f32 %v765, %v806
        %v838 = vsub.f32 %v768, %v806
        %v839 = vmul.f32 %v807, 1.442695
        %v840 = vpow.pop %v839
        %v841 = vmul.f32 %v808, 1.442695
        %v842 = vpow.pop %v841
        %v843 = vmul.f32 %v809, 1.442695
        %v844 = vpow.pop %v843
        %v845 = vmul.f32 %v810, 1.442695
        %v846 = vpow.pop %v845
        %v847 = vmul.f32 %v811, 1.442695
        %v848 = vpow.pop %v847
        %v849 = vmul.f32 %v812, 1.442695
        %v850 = vpow.pop %v849
        %v851 = vmul.f32 %v813, 1.442695
        %v852 = vpow.pop %v851
        %v853 = vmul.f32 %v814, 1.442695
        %v854 = vpow.pop %v853
        %v855 = vmul.f32 %v815, 1.442695
        %v856 = vpow.pop %v855
        %v857 = vmul.f32 %v816, 1.442695
        %v858 = vpow.pop %v857
        %v859 = vmul.f32 %v817, 1.442695
        %v860 = vpow.pop %v859
        %v861 = vmul.f32 %v818, 1.442695
        %v862 = vpow.pop %v861
        %v863 = vmul.f32 %v819, 1.442695
        %v864 = vpow.pop %v863
        %v865 = vmul.f32 %v820, 1.442695
        %v866 = vpow.pop %v865
        %v867 = vmul.f32 %v821, 1.442695
        %v868 = vpow.pop %v867
        %v869 = vmul.f32 %v822, 1.442695
        %v870 = vpow.pop %v869
        %v871 = vmul.f32 %v823, 1.442695
        %v872 = vpow.pop %v871
        %v873 = vmul.f32 %v824, 1.442695
        %v874 = vpow.pop %v873
        %v875 = vmul.f32 %v825, 1.442695
        %v876 = vpow.pop %v875
        %v877 = vmul.f32 %v826, 1.442695
        %v878 = vpow.pop %v877
        %v879 = vmul.f32 %v827, 1.442695
        %v880 = vpow.pop %v879
        %v881 = vmul.f32 %v828, 1.442695
        %v882 = vpow.pop %v881
        %v883 = vmul.f32 %v829, 1.442695
        %v884 = vpow.pop %v883
        %v885 = vmul.f32 %v830, 1.442695
        %v886 = vpow.pop %v885
        %v887 = vmul.f32 %v831, 1.442695
        %v888 = vpow.pop %v887
        %v889 = vmul.f32 %v832, 1.442695
        %v890 = vpow.pop %v889
        %v891 = vmul.f32 %v833, 1.442695
        %v892 = vpow.pop %v891
        %v893 = vmul.f32 %v834, 1.442695
        %v894 = vpow.pop %v893
        %v895 = vmul.f32 %v835, 1.442695
        %v896 = vpow.pop %v895
        %v897 = vmul.f32 %v836, 1.442695
        %v898 = vpow.pop %v897
        %v899 = vmul.f32 %v837, 1.442695
        %v900 = vpow.pop %v899
        %v901 = vmul.f32 %v838, 1.442695
        %v902 = vpow.pop %v901
        %v903 = vadd.f32 %v840, %v842
        %v904 = vadd.f32 %v903, %v844
        %v905 = vadd.f32 %v904, %v846
        %v906 = vadd.f32 %v905, %v848
        %v907 = vadd.f32 %v906, %v850
        %v908 = vadd.f32 %v907, %v852
        %v909 = vadd.f32 %v908, %v854
        %v910 = vadd.f32 %v909, %v856
        %v911 = vadd.f32 %v910, %v858
        %v912 = vadd.f32 %v911, %v860
        %v913 = vadd.f32 %v912, %v862
        %v914 = vadd.f32 %v913, %v864
        %v915 = vadd.f32 %v914, %v866
        %v916 = vadd.f32 %v915, %v868
        %v917 = vadd.f32 %v916, %v870
        %v918 = vadd.f32 %v917, %v872
        %v919 = vadd.f32 %v918, %v874
        %v920 = vadd.f32 %v919, %v876
        %v921 = vadd.f32 %v920, %v878
        %v922 = vadd.f32 %v921, %v880
        %v923 = vadd.f32 %v922, %v882
        %v924 = vadd.f32 %v923, %v884
        %v925 = vadd.f32 %v924, %v886
        %v926 = vadd.f32 %v925, %v888
        %v927 = vadd.f32 %v926, %v890
        %v928 = vadd.f32 %v927, %v892
        %v929 = vadd.f32 %v928, %v894
        %v930 = vadd.f32 %v929, %v896
        %v931 = vadd.f32 %v930, %v898
        %v932 = vadd.f32 %v931, %v900
        %v933 = vadd.f32 %v932, %v902
        %v934 = vrot.slane %v933, 4
        %v935 = vadd.f32 %v933, %v934
        %v936 = vrot.slane %v935, 2
        %v937 = vadd.f32 %v935, %v936
        %v938 = vrot.slane %v937, 1
        %v939 = vadd.f32 %v937, %v938
        %v940 = vrcp.pop %v939
        %v941 = vmul.f32 %v939, %v940
        %v942 = vsub.f32 1.0, %v941
        %v943 = vmul.f32 %v940, %v942
        %v944 = vadd.f32 %v940, %v943
        %vm945 = vweird.f32 %v939
        %vm946 = vweird.f32 %v940
        %vm947 = vmor %vm945, %vm946
        %v948 = vsel %vm947, %v940, %v944
        %v949 = vand.u32 2147483647, %v939
        %vm950 = vcmp.eq.f32.partialorder %v949, 8.507059e+37
        %v951 = vand.u32 %v939, 2147483648
        %v952 = vor.u32 1.1754944e-38, %v951
        %v953 = vsel %vm950, %v952, %v948
        %v954 = vld [vmem:[#allocation2] sm:$0xff]
        %v955 = vld [vmem:[#allocation2 + $0x8] sm:$0xff]
        %v956 = vld [vmem:[#allocation2 + $0x10] sm:$0xff]
        %v957 = vld [vmem:[#allocation2 + $0x18] sm:$0xff]
        %v958 = vld [vmem:[#allocation2 + $0x20] sm:$0xff]
        %v959 = vld [vmem:[#allocation2 + $0x28] sm:$0xff]
        %v960 = vld [vmem:[#allocation2 + $0x30] sm:$0xff]
        %v961 = vld [vmem:[#allocation2 + $0x38] sm:$0xff]
        %962 = vmatpush.msra.mxu0 %v870
        %963 = vmatpush.msra.mxu0 %v868
        %964 = vmatpush.msra.mxu0 %v866
        %965 = vmatpush.msra.mxu0 %v864
        %966 = vmatpush.msra.mxu0 %v862
        %967 = vmatpush.msra.mxu0 %v860
        %968 = vmatpush.msra.mxu0 %v858
        %969 = vmatpush.msra.mxu0 %v856
        %970 = vmatpush.msra.mxu0 %v854
        %971 = vmatpush.msra.mxu0 %v852
        %972 = vmatpush.msra.mxu0 %v850
        %973 = vmatpush.msra.mxu0 %v848
        %974 = vmatpush.msra.mxu0 %v846
        %975 = vmatpush.msra.mxu0 %v844
        %976 = vmatpush.msra.mxu0 %v842
        %977 = vmatpush.msra.mxu0 %v840
        %978 = vmatmul.f32.gmra.mxu0 %v954
        %v979 = vpop.f32.mrf.mxu0
        %v980 = vadd.f32 0.0, %v979
        %981 = vmatmul.f32.gmra.mxu0 %v956
        %v982 = vpop.f32.mrf.mxu0
        %v983 = vadd.f32 0.0, %v982
        %984 = vmatmul.f32.gmra.mxu0 %v958
        %v985 = vpop.f32.mrf.mxu0
        %v986 = vadd.f32 0.0, %v985
        %987 = vmatmul.f32.gmra.mxu0 %v960
        %v988 = vpop.f32.mrf.mxu0
        %v989 = vadd.f32 0.0, %v988
        %990 = vdwg.mxu0
        %991 = vmatpush.msra.mxu0 %v902
        %992 = vmatpush.msra.mxu0 %v900
        %993 = vmatpush.msra.mxu0 %v898
        %994 = vmatpush.msra.mxu0 %v896
        %995 = vmatpush.msra.mxu0 %v894
        %996 = vmatpush.msra.mxu0 %v892
        %997 = vmatpush.msra.mxu0 %v890
        %998 = vmatpush.msra.mxu0 %v888
        %999 = vmatpush.msra.mxu0 %v886
        %1000 = vmatpush.msra.mxu0 %v884
        %1001 = vmatpush.msra.mxu0 %v882
        %1002 = vmatpush.msra.mxu0 %v880
        %1003 = vmatpush.msra.mxu0 %v878
        %1004 = vmatpush.msra.mxu0 %v876
        %1005 = vmatpush.msra.mxu0 %v874
        %1006 = vmatpush.msra.mxu0 %v872
        %1007 = vmatmul.f32.gmra.mxu0 %v955
        %v1008 = vpop.f32.mrf.mxu0
        %v1009 = vadd.f32 %v980, %v1008
        %1010 = vmatmul.f32.gmra.mxu0 %v957
        %v1011 = vpop.f32.mrf.mxu0
        %v1012 = vadd.f32 %v983, %v1011
        %1013 = vmatmul.f32.gmra.mxu0 %v959
        %v1014 = vpop.f32.mrf.mxu0
        %v1015 = vadd.f32 %v986, %v1014
        %1016 = vmatmul.f32.gmra.mxu0 %v961
        %v1017 = vpop.f32.mrf.mxu0
        %v1018 = vadd.f32 %v989, %v1017
        %1019 = vdwg.mxu0
        %v1020 = vmul.f32 %v1009, %v953
        %v1021 = vmul.f32 %v1012, %v953
        %v1022 = vmul.f32 %v1015, %v953
        %v1023 = vmul.f32 %v1018, %v953
        %v1024 = vadd.f32 %v1020, %v391
        %v1025 = vadd.f32 %v1021, %v392
        %v1026 = vadd.f32 %v1022, %v393
        %v1027 = vadd.f32 %v1023, %v394
        %1028 = vst [vmem:[%s258] sm:$0xff] %v1024
        %1029 = vst [vmem:[%s258 + $0x8] sm:$0xff] %v1025
        %1030 = vst [vmem:[%s258 + $0x10] sm:$0xff] %v1026
        %1031 = vst [vmem:[%s258 + $0x18] sm:$0xff] %v1027
        %s1032 = sand.u32 %s154, 1
        %s1033 = scalar_lea.sflag [#allocation5], %s1032
        %s1034 = sand.u32 %s154, 1
        %s1035 = smul.addr %s1034, 32
        %s1036 = scalar_lea.vmem [#allocation6], %s1035
        // Predicated region
        $region49: #{tpu_custom_call.1} parent=39 // pred_check
          %p1037 = pneg %p164
        $region50: #{tpu_custom_call.1} parent=39 // pred_check_branch
          %1039 = sbr.rel (%p1037) target = $region52
        $region51: #{tpu_custom_call.1} parent=39 // pred_region
          %1041 = vsyncadd %s1033, 0
          %s1042 = smul.addr %s26, 8
          %s1043 = sadd.s32 %s27, %s1042
          %s1044 = smul.addr %s1043, 8
          %s1045 = scalar_lea.hbm %s5, %s1044
          %s1046 = sshll.u32 %s1036, 4
          %s1047 = int_to_ptr.vmem [resolvable:$true] %s1046
          %s1048 = sshll.u32 %s1045, 4
          %s1049 = int_to_ptr.hbm [resolvable:$true] %s1048
          %1054 = dma.vmem_to_hbm [thread:$0]  %s1047, 512, %s1049, %s1033, 128, 256, 8
        $region52: #{tpu_custom_call.1} parent=39 // pred_fallthru
          _
      $region40: #{tpu_custom_call.1} parent=5 // pred_fallthru
        _
      %p1055 = scmp.le.s32.totalorder 2, %s17
      // Predicated region
      $region53: #{tpu_custom_call.1} parent=5 // pred_check
        %p1056 = pneg %p1055
      $region54: #{tpu_custom_call.1} parent=5 // pred_check_branch
        %1058 = sbr.rel (%p1056) target = $region56
      $region55: #{tpu_custom_call.1} parent=5 // pred_region
        %s1059 = ssub.s32 %s17, 2
        // Predicated region
        $region57: #{tpu_custom_call.1} parent=55 // pred_check
          %p1060 = pneg %p170
        $region58: #{tpu_custom_call.1} parent=55 // pred_check_branch
          %1062 = sbr.rel (%p1060) target = $region60
        $region59: #{tpu_custom_call.1} parent=55 // pred_region
          %s1063 = sand.u32 %s155, 1
          %s1064 = scalar_lea.sflag [#allocation5], %s1063
          %s1065 = sand.u32 %s155, 1
          %s1066 = smul.addr %s1065, 32
          %s1067 = scalar_lea.vmem [#allocation6], %s1066
          %1069 = dma.done %s1064, 512
        $region60: #{tpu_custom_call.1} parent=55 // pred_fallthru
          _
      $region56: #{tpu_custom_call.1} parent=5 // pred_fallthru
        _
    $region6: #{tpu_custom_call.1} parent=1 // loop_footer
      %s21 = sadd.s32 1, %s17
    $region7: #{tpu_custom_call.1} parent=1 // loop_footer_branch
      %16 = sbr.rel target = $region3
    $region8: #{tpu_custom_call.1} parent=1 // loop_exit
      _
    %1070 = vsyncpa [#allocation4], 1
    %s1071 = scalar_lea.sflag [#allocation4], 1
    %1072 = vsyncpa %s1071, 1
    %1073 = vsyncpa [#allocation5], 1
    %s1074 = scalar_lea.sflag [#allocation5], 1
    %1075 = vsyncpa %s1074, 1

</llo_original>
